<compile_context>
chip_gen: v5e
topology: v5e:2x2
jax: 0.10.0
libtpu: 0.0.40
codegen_flags: <defaults>
</compile_context>

<pallas_src>
import functools
import math

import jax
import jax.numpy as jnp
from jax.experimental import pallas as pl
from jax.experimental.pallas import tpu as pltpu


LANE = 128           # pad every layer's fan_out to a multiple of the lane width
SUBLANE = 16         # batch-tile rows rounded to this (bf16-safe sublane multiple)
MAX_TILE_B = 1024    # upper bound on batch rows per grid step
MIN_GRID_STEPS = 2   # give the 'parallel' axis >=2 steps (both TCs on v7x)


def _round_up(x: int, m: int) -> int:
    return ((x + m - 1) // m) * m


def _fused_mlp_kernel(*refs, relu_flags):
    """One batch tile through the whole MLP (all layers unrolled).

    refs = (x_ref, w_0..w_{L-1}, b_0..b_{L-1}, o_ref)
      x_ref : (TB, Fin)     f32   un-padded input features
      w_l   : (K_l, N_l)    bf16  per-layer zero-padded weights (in x out)
      b_l   : (1,  N_l)     f32   per-layer zero-padded biases
      o_ref : (TB, N_last)  f32   lane-dense padded output
    """
    n_layers = len(relu_flags)
    x_ref = refs[0]
    w_refs = refs[1:1 + n_layers]
    b_refs = refs[1 + n_layers:1 + 2 * n_layers]
    o_ref = refs[1 + 2 * n_layers]

    h = x_ref[...]  # f32; activations never leave on-chip memory between layers
    for layer, apply_relu in enumerate(relu_flags):
        # bf16 MXU matmul, f32 accumulation; elementwise (bias/ReLU) stays f32.
        acc = jnp.dot(h.astype(jnp.bfloat16), w_refs[layer][...],
                      preferred_element_type=jnp.float32)
        acc = acc + b_refs[layer][...]
        if apply_relu:
            acc = jnp.maximum(acc, 0.0)
        h = acc
    o_ref[...] = h.astype(o_ref.dtype)


def fused_mlp(x, weights, biases, *, relu_flags, tile_b, vmem_limit_bytes):
    """x: [B_pad, Fin] f32; weights[l]: [K_l, N_l] bf16; biases[l]: [1, N_l] f32.

    Returns [B_pad, N_last] f32.
    """
    B_pad, Fin = x.shape
    N_last = weights[-1].shape[1]
    num_tiles = B_pad // tile_b

    flops = 2 * B_pad * sum(int(w.shape[0]) * int(w.shape[1]) for w in weights)
    bytes_accessed = (int(x.size) * 4 + B_pad * N_last * 4
                      + sum(int(w.size) * 2 for w in weights)
                      + sum(int(b.size) * 4 for b in biases))
    kernel = functools.partial(_fused_mlp_kernel, relu_flags=tuple(relu_flags))

    def build(single_buffer_weights):
        if single_buffer_weights:
            # Constant-index blocks: single-buffered -> half the weight VMEM.
            def const_spec(shape):
                return pl.BlockSpec(shape, lambda i: (0, 0),
                                    pipeline_mode=pl.Buffered(1))
        else:
            def const_spec(shape):
                return pl.BlockSpec(shape, lambda i: (0, 0))

        in_specs = (
            [pl.BlockSpec((tile_b, Fin), lambda i: (i, 0))]      # batch-tiled acts
            + [const_spec(tuple(w.shape)) for w in weights]       # resident weights
            + [const_spec(tuple(b.shape)) for b in biases]        # resident biases
        )
        return pl.pallas_call(
            kernel,
            out_shape=jax.ShapeDtypeStruct((B_pad, N_last), jnp.float32),
            grid_spec=pl.GridSpec(
                grid=(num_tiles,),
                in_specs=in_specs,
                out_specs=pl.BlockSpec((tile_b, N_last), lambda i: (i, 0)),
            ),
            compiler_params=pltpu.CompilerParams(
                dimension_semantics=("parallel",),    # shard batch tiles across TCs
                vmem_limit_bytes=int(vmem_limit_bytes),
            ),
            cost_estimate=pl.CostEstimate(
                flops=flops, transcendentals=0, bytes_accessed=bytes_accessed),
        )

    try:
        return build(single_buffer_weights=True)(x, *weights, *biases)
    except Exception:
        # Fallback for JAX versions without BlockSpec.pipeline_mode / Buffered(1):
        # default double-buffered (constant-index) weight blocks.
        return build(single_buffer_weights=False)(x, *weights, *biases)


class FCBlockPallas:
    """JAX/Pallas port of FCBlock(in_features, features, out_features,
    nonlinearity='relu', last_nonlinearity=None, batch_norm=False)."""

    def __init__(self, in_features, features, out_features, key):
        self.hidden_features = [int(in_features)] + list(features) + [int(out_features)]
        self.in_features = int(in_features)
        self.out_features = int(out_features)
        n_layers = len(self.hidden_features) - 1
        self.params = []
        for i in range(n_layers):
            fan_in = self.hidden_features[i]
            fan_out = self.hidden_features[i + 1]
            key, kw, kb = jax.random.split(key, 3)
            hidden = i < n_layers - 1
            if hidden:
                # init_weights_normal: kaiming_normal(relu, mode='fan_out') on weight,
                # uniform(-1, 1) on bias.  PyTorch weight is [out,in]; fan_out = out.
                std = math.sqrt(2.0) / math.sqrt(fan_out)
                w = std * jax.random.normal(kw, (fan_in, fan_out), dtype=jnp.float32)
                b = jax.random.uniform(kb, (fan_out,), dtype=jnp.float32,
                                       minval=-1.0, maxval=1.0)
            else:
                # last layer: plain nn.Linear default init (uniform +/- 1/sqrt(fan_in))
                bound = 1.0 / math.sqrt(fan_in)
                w = jax.random.uniform(kw, (fan_in, fan_out), dtype=jnp.float32,
                                       minval=-bound, maxval=bound)
                b = jax.random.uniform(kb, (fan_out,), dtype=jnp.float32,
                                       minval=-bound, maxval=bound)
            self.params.append((w, b, hidden))
        # TODO(synk): batch_norm / group_norm / dropout / non-relu nonlinearities are
        # not exercised by the default FCBlock config and are omitted here.

        # --- Per-layer zero-padded weights/biases for the fused kernel -------
        # fan_out of layer l is padded to its own 128-multiple N_l; fan_in of the
        # next layer uses the same N_l (layer 0 keeps the raw in_features so
        # un-padded coords feed straight in).  Zero-padded rows/cols + zero biases
        # keep padded lanes exactly zero through Linear+ReLU (0 is exact in bf16).
        self.w_pad = []
        self.b_pad = []
        k_prev = self.in_features
        for (w, b, _) in self.params:
            n_l = _round_up(w.shape[1], LANE)
            w_p = jnp.zeros((k_prev, n_l), jnp.float32)
            w_p = w_p.at[:w.shape[0], :w.shape[1]].set(w)
            b_p = jnp.zeros((1, n_l), jnp.float32).at[0, :b.shape[0]].set(b)
            self.w_pad.append(w_p.astype(jnp.bfloat16))   # bf16 MXU operands
            self.b_pad.append(b_p)                        # f32 bias add
            k_prev = n_l
        self.out_pad = k_prev
        self.relu_flags = tuple(h for _, _, h in self.params)
        # TODO(synk): for very large nets (sum_l K_l*N_l approaching the VMEM cap,
        # esp. on v7x's 64 MiB) stream weights per-layer via emit_pipeline /
        # make_async_copy instead of keeping the full stack resident.

    # ---------------- VMEM budgeting & tile selection ----------------------
    @staticmethod
    def _vmem_cap():
        try:
            cap = getattr(pltpu.get_tpu_info(), "vmem_capacity_bytes", None)
            if cap:
                return int(0.75 * cap)
        except Exception:
            pass
        return 48 * 1024 * 1024   # safe on v7x's 64 MiB VMEM

    def _vmem_estimate(self, tile_b, fin=None):
        fin = self.in_features if fin is None else fin
        act = 2 * 2 * tile_b * (fin + self.out_pad) * 4           # in+out, double-buffered
        wgt = sum(int(w.size) * 2 for w in self.w_pad)             # bf16 weights
        bia = sum(int(b.size) * 4 for b in self.b_pad)
        mid = 2 * tile_b * max(int(w.shape[1]) for w in self.w_pad) * 4  # live intermediates
        # x2 on weights/biases: headroom in case the double-buffer fallback is used.
        return act + 2 * (wgt + bia) + mid

    def _vmem_limit_bytes(self, tile_b, fin):
        est = self._vmem_estimate(tile_b, fin)
        return int(min(self._vmem_cap(), max(32 * 1024 * 1024, 2 * est)))

    def _choose_tile_b(self, B):
        # Minimum #tiles for the MAX_TILE_B cap; >=2 steps when B allows so the
        # "parallel" grid axis spans both TensorCores on v7x; tail-waste aware.
        n_tiles = pl.cdiv(B, MAX_TILE_B)
        if B >= 2 * SUBLANE:
            n_tiles = max(n_tiles, MIN_GRID_STEPS)
        tile_b = _round_up(pl.cdiv(B, n_tiles), SUBLANE)
        # Shrink the tile if activations would blow the VMEM budget.
        while tile_b > SUBLANE and self._vmem_estimate(tile_b) > self._vmem_cap():
            tile_b = _round_up(tile_b // 2, SUBLANE)
        n_tiles = pl.cdiv(B, tile_b)
        return tile_b, n_tiles

    # ---------------- forward ----------------------------------------------
    def __call__(self, coords):
        B, Fin = coords.shape
        assert Fin == self.in_features
        tile_b, num_tiles = self._choose_tile_b(B)
        B_pad = tile_b * num_tiles
        x = coords.astype(jnp.float32)
        if B_pad != B:
            # Pad the batch only (features stay un-padded: full last-dim block).
            x = jnp.zeros((B_pad, Fin), jnp.float32).at[:B].set(x)
        out_pad = fused_mlp(x, self.w_pad, self.b_pad,
                            relu_flags=self.relu_flags, tile_b=tile_b,
                            vmem_limit_bytes=self._vmem_limit_bytes(tile_b, Fin))
        return out_pad[:B, :self.out_features]

    # Pure-JAX f32 reference (PyTorch semantics)
    def reference(self, coords):
        x = coords.astype(jnp.float32)
        for w, b, hidden in self.params:
            x = x @ w + b
            if hidden:
                x = jnp.maximum(x, 0.0)
        return x


if __name__ == "__main__":
    key = jax.random.PRNGKey(0)
    k_in, k_model = jax.random.split(key)

    batch, in_features, out_features = 8, 4, 3
    features = [32, 32]

    x = jax.random.normal(k_in, (batch, in_features), dtype=jnp.float32)

    model = FCBlockPallas(in_features, features, out_features, k_model)

    out = jax.block_until_ready(model(x))
    assert out.shape == (batch, out_features)

    # bf16 matmuls (f32 accumulate) vs. pure-f32 reference => loose tolerance.
    ref = model.reference(x)
    max_err = float(jnp.max(jnp.abs(out - ref)))
    assert jnp.allclose(out, ref, atol=3e-2, rtol=3e-2), (
        f"Pallas output mismatch vs reference (max |err| = {max_err})")

    print("KERNEL_OK")
</pallas_src>

<mosaic_0001>
module attributes {stable_mosaic.version = 11 : i64} {
  func.func @_fused_mlp_kernel(%arg0: i32, %arg1: memref<16x4xf32, #tpu.memory_space<vmem>>, %arg2: memref<4x128xbf16, #tpu.memory_space<vmem>>, %arg3: memref<128x128xbf16, #tpu.memory_space<vmem>>, %arg4: memref<128x128xbf16, #tpu.memory_space<vmem>>, %arg5: memref<1x128xf32, #tpu.memory_space<vmem>>, %arg6: memref<1x128xf32, #tpu.memory_space<vmem>>, %arg7: memref<1x128xf32, #tpu.memory_space<vmem>>, %arg8: memref<16x128xf32, #tpu.memory_space<vmem>>) attributes {dimension_semantics = [#tpu.dimension_semantics<parallel>], iteration_bounds = array<i64: 1>, scalar_prefetch = 0 : i64, scratch_operands = 0 : i64, tpu.core_type = #tpu.core_type<tc>, window_params = [{transform_indices = @transform_0, window_bounds = array<i64: 16, 4>}, {pipeline_mode = #tpu.pipeline_mode<synchronous>, transform_indices = @transform_1, window_bounds = array<i64: 4, 128>}, {pipeline_mode = #tpu.pipeline_mode<synchronous>, transform_indices = @transform_2, window_bounds = array<i64: 128, 128>}, {pipeline_mode = #tpu.pipeline_mode<synchronous>, transform_indices = @transform_3, window_bounds = array<i64: 128, 128>}, {pipeline_mode = #tpu.pipeline_mode<synchronous>, transform_indices = @transform_4, window_bounds = array<i64: 1, 128>}, {pipeline_mode = #tpu.pipeline_mode<synchronous>, transform_indices = @transform_5, window_bounds = array<i64: 1, 128>}, {pipeline_mode = #tpu.pipeline_mode<synchronous>, transform_indices = @transform_6, window_bounds = array<i64: 1, 128>}, {transform_indices = @transform_7, window_bounds = array<i64: 16, 128>}]} {
    %c0 = arith.constant 0 : index
    %c0_0 = arith.constant 0 : index
    %0 = vector.load %arg1[%c0, %c0_0] : memref<16x4xf32, #tpu.memory_space<vmem>>, vector<16x4xf32>
    %1 = arith.truncf %0 : vector<16x4xf32> to vector<16x4xbf16>
    %c0_1 = arith.constant 0 : index
    %c0_2 = arith.constant 0 : index
    %2 = vector.load %arg2[%c0_1, %c0_2] : memref<4x128xbf16, #tpu.memory_space<vmem>>, vector<4x128xbf16>
    %cst = arith.constant dense<0.000000e+00> : vector<16x128xf32>
    %3 = tpu.matmul %1, %2, %cst {dimension_numbers = #tpu.dot_dimension_numbers<[1], [0], [0], [1], [0, 0, 1, 1], [], []>} : vector<16x4xbf16>, vector<4x128xbf16>, vector<16x128xf32> -> vector<16x128xf32>
    %c0_3 = arith.constant 0 : index
    %c0_4 = arith.constant 0 : index
    %4 = vector.load %arg5[%c0_3, %c0_4] : memref<1x128xf32, #tpu.memory_space<vmem>>, vector<1x128xf32>
    %5 = vector.broadcast %4 : vector<1x128xf32> to vector<16x128xf32>
    %6 = arith.addf %3, %5 : vector<16x128xf32>
    %cst_5 = arith.constant 0.000000e+00 : f32
    %7 = vector.broadcast %cst_5 : f32 to vector<16x128xf32>
    %8 = arith.maximumf %6, %7 : vector<16x128xf32>
    %9 = arith.truncf %8 : vector<16x128xf32> to vector<16x128xbf16>
    %c0_6 = arith.constant 0 : index
    %c0_7 = arith.constant 0 : index
    %10 = vector.load %arg3[%c0_6, %c0_7] : memref<128x128xbf16, #tpu.memory_space<vmem>>, vector<128x128xbf16>
    %cst_8 = arith.constant dense<0.000000e+00> : vector<16x128xf32>
    %11 = tpu.matmul %9, %10, %cst_8 {dimension_numbers = #tpu.dot_dimension_numbers<[1], [0], [0], [1], [0, 0, 1, 1], [], []>} : vector<16x128xbf16>, vector<128x128xbf16>, vector<16x128xf32> -> vector<16x128xf32>
    %c0_9 = arith.constant 0 : index
    %c0_10 = arith.constant 0 : index
    %12 = vector.load %arg6[%c0_9, %c0_10] : memref<1x128xf32, #tpu.memory_space<vmem>>, vector<1x128xf32>
    %13 = vector.broadcast %12 : vector<1x128xf32> to vector<16x128xf32>
    %14 = arith.addf %11, %13 : vector<16x128xf32>
    %cst_11 = arith.constant 0.000000e+00 : f32
    %15 = vector.broadcast %cst_11 : f32 to vector<16x128xf32>
    %16 = arith.maximumf %14, %15 : vector<16x128xf32>
    %17 = arith.truncf %16 : vector<16x128xf32> to vector<16x128xbf16>
    %c0_12 = arith.constant 0 : index
    %c0_13 = arith.constant 0 : index
    %18 = vector.load %arg4[%c0_12, %c0_13] : memref<128x128xbf16, #tpu.memory_space<vmem>>, vector<128x128xbf16>
    %cst_14 = arith.constant dense<0.000000e+00> : vector<16x128xf32>
    %19 = tpu.matmul %17, %18, %cst_14 {dimension_numbers = #tpu.dot_dimension_numbers<[1], [0], [0], [1], [0, 0, 1, 1], [], []>} : vector<16x128xbf16>, vector<128x128xbf16>, vector<16x128xf32> -> vector<16x128xf32>
    %c0_15 = arith.constant 0 : index
    %c0_16 = arith.constant 0 : index
    %20 = vector.load %arg7[%c0_15, %c0_16] : memref<1x128xf32, #tpu.memory_space<vmem>>, vector<1x128xf32>
    %21 = vector.broadcast %20 : vector<1x128xf32> to vector<16x128xf32>
    %22 = arith.addf %19, %21 : vector<16x128xf32>
    %c0_17 = arith.constant 0 : index
    %c0_18 = arith.constant 0 : index
    %23 = vector.load %arg8[%c0_17, %c0_18] : memref<16x128xf32, #tpu.memory_space<vmem>>, vector<16x128xf32>
    tpu.vector_store %arg8[%c0_17, %c0_18], %22 {strides = array<i32>} : memref<16x128xf32, #tpu.memory_space<vmem>>, vector<16x128xf32>,
    return
  }
  func.func @transform_0(%arg0: i32) -> (i32, i32) {
    %c0_i32 = arith.constant 0 : i32
    %c0_i32_0 = arith.constant 0 : i32
    return %arg0, %c0_i32 : i32, i32
  }
  func.func @transform_1(%arg0: i32) -> (i32, i32) {
    %c0_i32 = arith.constant 0 : i32
    %c0_i32_0 = arith.constant 0 : i32
    %c0_i32_1 = arith.constant 0 : i32
    return %c0_i32, %c0_i32_0 : i32, i32
  }
  func.func @transform_2(%arg0: i32) -> (i32, i32) {
    %c0_i32 = arith.constant 0 : i32
    %c0_i32_0 = arith.constant 0 : i32
    %c0_i32_1 = arith.constant 0 : i32
    return %c0_i32, %c0_i32_0 : i32, i32
  }
  func.func @transform_3(%arg0: i32) -> (i32, i32) {
    %c0_i32 = arith.constant 0 : i32
    %c0_i32_0 = arith.constant 0 : i32
    %c0_i32_1 = arith.constant 0 : i32
    return %c0_i32, %c0_i32_0 : i32, i32
  }
  func.func @transform_4(%arg0: i32) -> (i32, i32) {
    %c0_i32 = arith.constant 0 : i32
    %c0_i32_0 = arith.constant 0 : i32
    %c0_i32_1 = arith.constant 0 : i32
    return %c0_i32, %c0_i32_0 : i32, i32
  }
  func.func @transform_5(%arg0: i32) -> (i32, i32) {
    %c0_i32 = arith.constant 0 : i32
    %c0_i32_0 = arith.constant 0 : i32
    %c0_i32_1 = arith.constant 0 : i32
    return %c0_i32, %c0_i32_0 : i32, i32
  }
  func.func @transform_6(%arg0: i32) -> (i32, i32) {
    %c0_i32 = arith.constant 0 : i32
    %c0_i32_0 = arith.constant 0 : i32
    %c0_i32_1 = arith.constant 0 : i32
    return %c0_i32, %c0_i32_0 : i32, i32
  }
  func.func @transform_7(%arg0: i32) -> (i32, i32) {
    %c0_i32 = arith.constant 0 : i32
    %c0_i32_0 = arith.constant 0 : i32
    return %arg0, %c0_i32 : i32, i32
  }
}

module attributes {stable_mosaic.version = 11 : i64} {
  func.func @_fused_mlp_kernel(%arg0: i32, %arg1: memref<16x4xf32, #tpu.memory_space<vmem>>, %arg2: memref<4x128xbf16, #tpu.memory_space<vmem>>, %arg3: memref<128x128xbf16, #tpu.memory_space<vmem>>, %arg4: memref<128x128xbf16, #tpu.memory_space<vmem>>, %arg5: memref<1x128xf32, #tpu.memory_space<vmem>>, %arg6: memref<1x128xf32, #tpu.memory_space<vmem>>, %arg7: memref<1x128xf32, #tpu.memory_space<vmem>>, %arg8: memref<16x128xf32, #tpu.memory_space<vmem>>) attributes {dimension_semantics = [#tpu.dimension_semantics<parallel>], iteration_bounds = array<i64: 1>, scalar_prefetch = 0 : i64, scratch_operands = 0 : i64, tpu.core_type = #tpu.core_type<tc>, window_params = [{transform_indices = @transform_0, window_bounds = array<i64: 16, 4>}, {pipeline_mode = #tpu.pipeline_mode<synchronous>, transform_indices = @transform_1, window_bounds = array<i64: 4, 128>}, {pipeline_mode = #tpu.pipeline_mode<synchronous>, transform_indices = @transform_2, window_bounds = array<i64: 128, 128>}, {pipeline_mode = #tpu.pipeline_mode<synchronous>, transform_indices = @transform_3, window_bounds = array<i64: 128, 128>}, {pipeline_mode = #tpu.pipeline_mode<synchronous>, transform_indices = @transform_4, window_bounds = array<i64: 1, 128>}, {pipeline_mode = #tpu.pipeline_mode<synchronous>, transform_indices = @transform_5, window_bounds = array<i64: 1, 128>}, {pipeline_mode = #tpu.pipeline_mode<synchronous>, transform_indices = @transform_6, window_bounds = array<i64: 1, 128>}, {transform_indices = @transform_7, window_bounds = array<i64: 16, 128>}]} {
    %c0 = arith.constant 0 : index
    %c0_0 = arith.constant 0 : index
    %0 = vector.load %arg1[%c0, %c0_0] : memref<16x4xf32, #tpu.memory_space<vmem>>, vector<16x4xf32>
    %1 = arith.truncf %0 : vector<16x4xf32> to vector<16x4xbf16>
    %c0_1 = arith.constant 0 : index
    %c0_2 = arith.constant 0 : index
    %2 = vector.load %arg2[%c0_1, %c0_2] : memref<4x128xbf16, #tpu.memory_space<vmem>>, vector<4x128xbf16>
    %cst = arith.constant dense<0.000000e+00> : vector<16x128xf32>
    %3 = tpu.matmul %1, %2, %cst {dimension_numbers = #tpu.dot_dimension_numbers<[1], [0], [0], [1], [0, 0, 1, 1], [], []>} : vector<16x4xbf16>, vector<4x128xbf16>, vector<16x128xf32> -> vector<16x128xf32>
    %c0_3 = arith.constant 0 : index
    %c0_4 = arith.constant 0 : index
    %4 = vector.load %arg5[%c0_3, %c0_4] : memref<1x128xf32, #tpu.memory_space<vmem>>, vector<1x128xf32>
    %5 = vector.broadcast %4 : vector<1x128xf32> to vector<16x128xf32>
    %6 = arith.addf %3, %5 : vector<16x128xf32>
    %cst_5 = arith.constant 0.000000e+00 : f32
    %7 = vector.broadcast %cst_5 : f32 to vector<16x128xf32>
    %8 = arith.maximumf %6, %7 : vector<16x128xf32>
    %9 = arith.truncf %8 : vector<16x128xf32> to vector<16x128xbf16>
    %c0_6 = arith.constant 0 : index
    %c0_7 = arith.constant 0 : index
    %10 = vector.load %arg3[%c0_6, %c0_7] : memref<128x128xbf16, #tpu.memory_space<vmem>>, vector<128x128xbf16>
    %cst_8 = arith.constant dense<0.000000e+00> : vector<16x128xf32>
    %11 = tpu.matmul %9, %10, %cst_8 {dimension_numbers = #tpu.dot_dimension_numbers<[1], [0], [0], [1], [0, 0, 1, 1], [], []>} : vector<16x128xbf16>, vector<128x128xbf16>, vector<16x128xf32> -> vector<16x128xf32>
    %c0_9 = arith.constant 0 : index
    %c0_10 = arith.constant 0 : index
    %12 = vector.load %arg6[%c0_9, %c0_10] : memref<1x128xf32, #tpu.memory_space<vmem>>, vector<1x128xf32>
    %13 = vector.broadcast %12 : vector<1x128xf32> to vector<16x128xf32>
    %14 = arith.addf %11, %13 : vector<16x128xf32>
    %cst_11 = arith.constant 0.000000e+00 : f32
    %15 = vector.broadcast %cst_11 : f32 to vector<16x128xf32>
    %16 = arith.maximumf %14, %15 : vector<16x128xf32>
    %17 = arith.truncf %16 : vector<16x128xf32> to vector<16x128xbf16>
    %c0_12 = arith.constant 0 : index
    %c0_13 = arith.constant 0 : index
    %18 = vector.load %arg4[%c0_12, %c0_13] : memref<128x128xbf16, #tpu.memory_space<vmem>>, vector<128x128xbf16>
    %cst_14 = arith.constant dense<0.000000e+00> : vector<16x128xf32>
    %19 = tpu.matmul %17, %18, %cst_14 {dimension_numbers = #tpu.dot_dimension_numbers<[1], [0], [0], [1], [0, 0, 1, 1], [], []>} : vector<16x128xbf16>, vector<128x128xbf16>, vector<16x128xf32> -> vector<16x128xf32>
    %c0_15 = arith.constant 0 : index
    %c0_16 = arith.constant 0 : index
    %20 = vector.load %arg7[%c0_15, %c0_16] : memref<1x128xf32, #tpu.memory_space<vmem>>, vector<1x128xf32>
    %21 = vector.broadcast %20 : vector<1x128xf32> to vector<16x128xf32>
    %22 = arith.addf %19, %21 : vector<16x128xf32>
    %c0_17 = arith.constant 0 : index
    %c0_18 = arith.constant 0 : index
    %23 = vector.load %arg8[%c0_17, %c0_18] : memref<16x128xf32, #tpu.memory_space<vmem>>, vector<16x128xf32>
    tpu.vector_store %arg8[%c0_17, %c0_18], %22 {strides = array<i32>} : memref<16x128xf32, #tpu.memory_space<vmem>>, vector<16x128xf32>,
    return
  }
  func.func @transform_0(%arg0: i32) -> (i32, i32) {
    %c0_i32 = arith.constant 0 : i32
    %c0_i32_0 = arith.constant 0 : i32
    return %arg0, %c0_i32 : i32, i32
  }
  func.func @transform_1(%arg0: i32) -> (i32, i32) {
    %c0_i32 = arith.constant 0 : i32
    %c0_i32_0 = arith.constant 0 : i32
    %c0_i32_1 = arith.constant 0 : i32
    return %c0_i32, %c0_i32_0 : i32, i32
  }
  func.func @transform_2(%arg0: i32) -> (i32, i32) {
    %c0_i32 = arith.constant 0 : i32
    %c0_i32_0 = arith.constant 0 : i32
    %c0_i32_1 = arith.constant 0 : i32
    return %c0_i32, %c0_i32_0 : i32, i32
  }
  func.func @transform_3(%arg0: i32) -> (i32, i32) {
    %c0_i32 = arith.constant 0 : i32
    %c0_i32_0 = arith.constant 0 : i32
    %c0_i32_1 = arith.constant 0 : i32
    return %c0_i32, %c0_i32_0 : i32, i32
  }
  func.func @transform_4(%arg0: i32) -> (i32, i32) {
    %c0_i32 = arith.constant 0 : i32
    %c0_i32_0 = arith.constant 0 : i32
    %c0_i32_1 = arith.constant 0 : i32
    return %c0_i32, %c0_i32_0 : i32, i32
  }
  func.func @transform_5(%arg0: i32) -> (i32, i32) {
    %c0_i32 = arith.constant 0 : i32
    %c0_i32_0 = arith.constant 0 : i32
    %c0_i32_1 = arith.constant 0 : i32
    return %c0_i32, %c0_i32_0 : i32, i32
  }
  func.func @transform_6(%arg0: i32) -> (i32, i32) {
    %c0_i32 = arith.constant 0 : i32
    %c0_i32_0 = arith.constant 0 : i32
    %c0_i32_1 = arith.constant 0 : i32
    return %c0_i32, %c0_i32_0 : i32, i32
  }
  func.func @transform_7(%arg0: i32) -> (i32, i32) {
    %c0_i32 = arith.constant 0 : i32
    %c0_i32_0 = arith.constant 0 : i32
    return %arg0, %c0_i32 : i32, i32
  }
}

</mosaic_0001>

<llo_original>
// kernel: tpu_custom_call.1
$region0: #{tpu_custom_call.1}
  #allocation0 [shape = 'u32[]', space=smem, size = 0x4, offset = 0x4, fixed_abs, tag = 'smem constant byte address 0x4 - core index']
  #allocation1 [shape = 'u32[72,128]{1,0:T(1,128)}', space=vmem, size = 0x9000, scoped, tag = 'internal scratch']
  %s0 = inlined_call_operand.vmem [shape: f32[16,4], index: 0, kind: input, shape index: {}]
  %s1 = inlined_call_operand.vmem [shape: bf16[4,128], index: 1, kind: input, shape index: {}]
  %s2 = inlined_call_operand.hbm [shape: bf16[128,128], index: 2, kind: input, shape index: {}]
  %s3 = inlined_call_operand.hbm [shape: bf16[128,128], index: 3, kind: input, shape index: {}]
  %s4 = inlined_call_operand.vmem [shape: f32[1,128], index: 4, kind: input, shape index: {}]
  %s5 = inlined_call_operand.vmem [shape: f32[1,128], index: 5, kind: input, shape index: {}]
  %s6 = inlined_call_operand.vmem [shape: f32[1,128], index: 6, kind: input, shape index: {}]
  %s7 = inlined_call_operand.hbm [shape: f32[16,128], index: 7, kind: output, shape index: {}]
  %s8 = sld [smem:[#allocation0]]
  $region46: #{tpu_custom_call.1} parent=0
    _
  %s10 = ssub.s32 1, %s8
  %s11 = scalar_select 0, %s10, %s8
  $region1: #{tpu_custom_call.1} parent=0
    #allocation2 [shape = 'u8[32768]{0}', space=vmem, size = 0x8000, scoped, tag = 'input window, operand 2, single buffered']
    #allocation3 [shape = 's32[1]{0}', space=sflag, size = 0x4, scoped, tag = 'scoped memory for tpu_custom_call.1']
    #allocation4 [shape = 's32[1]{0}', space=sflag, size = 0x4, scoped, tag = 'scoped memory for tpu_custom_call.1']
    #allocation5 [shape = 'u8[32768]{0}', space=vmem, size = 0x8000, scoped, tag = 'input window, operand 3, single buffered']
    #allocation6 [shape = 's32[1]{0}', space=sflag, size = 0x4, scoped, tag = 'scoped memory for tpu_custom_call.1']
    #allocation7 [shape = 'u8[8192]{0}', space=vmem, size = 0x2000, scoped, tag = 'output window, operand 0, single buffered']
    %12 = vsyncpa [#allocation3], 0
    %13 = vsyncpa [#allocation6], 0
    %14 = vsyncpa [#allocation4], 0
    // Predicated region
    $region2: #{tpu_custom_call.1} parent=1 // pred_check
      _
    $region3: #{tpu_custom_call.1} parent=1 // pred_check_branch
      %16 = sbr.rel (0) target = $region5
    $region4: #{tpu_custom_call.1} parent=1 // pred_region
      _
    $region5: #{tpu_custom_call.1} parent=1 // pred_fallthru
      _
    // Predicated region
    $region6: #{tpu_custom_call.1} parent=1 // pred_check
      _
    $region7: #{tpu_custom_call.1} parent=1 // pred_check_branch
      %18 = sbr.rel (0) target = $region9
    $region8: #{tpu_custom_call.1} parent=1 // pred_region
      _
    $region9: #{tpu_custom_call.1} parent=1 // pred_fallthru
      _
    // Predicated region
    $region10: #{tpu_custom_call.1} parent=1 // pred_check
      _
    $region11: #{tpu_custom_call.1} parent=1 // pred_check_branch
      %20 = sbr.rel (0) target = $region13
    $region12: #{tpu_custom_call.1} parent=1 // pred_region
      %22 = vsyncadd [#allocation3], 0
      %s23 = sshll.u32 %s2, 4
      %s24 = int_to_ptr.hbm [resolvable:$true] %s23
      %s25 = sshll.u32 [#allocation2], 4
      %s26 = int_to_ptr.vmem [resolvable:$true] %s25
      %31 = dma.hbm_to_vmem [thread:$0]  %s24, 1024, %s26, [#allocation3], 64, 64, 4
    $region13: #{tpu_custom_call.1} parent=1 // pred_fallthru
      _
    // Predicated region
    $region14: #{tpu_custom_call.1} parent=1 // pred_check
      _
    $region15: #{tpu_custom_call.1} parent=1 // pred_check_branch
      %33 = sbr.rel (0) target = $region17
    $region16: #{tpu_custom_call.1} parent=1 // pred_region
      %35 = vsyncadd [#allocation6], 0
      %s36 = sshll.u32 %s3, 4
      %s37 = int_to_ptr.hbm [resolvable:$true] %s36
      %s38 = sshll.u32 [#allocation5], 4
      %s39 = int_to_ptr.vmem [resolvable:$true] %s38
      %44 = dma.hbm_to_vmem [thread:$0]  %s37, 1024, %s39, [#allocation6], 64, 64, 4
    $region17: #{tpu_custom_call.1} parent=1 // pred_fallthru
      _
    // Predicated region
    $region18: #{tpu_custom_call.1} parent=1 // pred_check
      _
    $region19: #{tpu_custom_call.1} parent=1 // pred_check_branch
      %46 = sbr.rel (0) target = $region21
    $region20: #{tpu_custom_call.1} parent=1 // pred_region
      _
    $region21: #{tpu_custom_call.1} parent=1 // pred_fallthru
      _
    // Predicated region
    $region22: #{tpu_custom_call.1} parent=1 // pred_check
      _
    $region23: #{tpu_custom_call.1} parent=1 // pred_check_branch
      %48 = sbr.rel (0) target = $region25
    $region24: #{tpu_custom_call.1} parent=1 // pred_region
      _
    $region25: #{tpu_custom_call.1} parent=1 // pred_fallthru
      _
    // Predicated region
    $region26: #{tpu_custom_call.1} parent=1 // pred_check
      _
    $region27: #{tpu_custom_call.1} parent=1 // pred_check_branch
      %50 = sbr.rel (0) target = $region29
    $region28: #{tpu_custom_call.1} parent=1 // pred_region
      _
    $region29: #{tpu_custom_call.1} parent=1 // pred_fallthru
      _
    // Predicated region
    $region30: #{tpu_custom_call.1} parent=1 // pred_check
      _
    $region31: #{tpu_custom_call.1} parent=1 // pred_check_branch
      %52 = sbr.rel (0) target = $region33
    $region32: #{tpu_custom_call.1} parent=1 // pred_region
      %54 = dma.done [#allocation3], 1024
    $region33: #{tpu_custom_call.1} parent=1 // pred_fallthru
      _
    // Predicated region
    $region34: #{tpu_custom_call.1} parent=1 // pred_check
      _
    $region35: #{tpu_custom_call.1} parent=1 // pred_check_branch
      %56 = sbr.rel (0) target = $region37
    $region36: #{tpu_custom_call.1} parent=1 // pred_region
      %58 = dma.done [#allocation6], 1024
    $region37: #{tpu_custom_call.1} parent=1 // pred_fallthru
      _
    %v60 = vld [vmem:[%s0] sm:$0xff]
    %v61 = vld [vmem:[%s0 + $0x8] sm:$0xff]
    %v62 = vpack.c.bf16 %v61, %v60
    %v63 = vld [vmem:[%s1] sm:$0x3]
    %v64 = vld [vmem:[%s4] sm:$0x1]
    %v66 = vperm.slane %v64, 0
    %vm68 = vcmask 31744
    %v70 = vsel %vm68, %v62, 0
    %vm72 = vcmask 1041408
    %v74 = vsel %vm72, %v63, 0
    %76 = vmatpush.bf16.msra.mxu0 0
    %77 = vmatpush.bf16.msra.mxu0 0
    %78 = vmatpush.bf16.msra.mxu0 0
    %79 = vmatpush.bf16.msra.mxu0 0
    %80 = vmatpush.bf16.msra.mxu0 0
    %81 = vmatpush.bf16.msra.mxu0 0
    %82 = vmatpush.bf16.msra.mxu0 0
    %83 = vmatpush.bf16.msra.mxu0 %v74
    %84 = vmatmul.bf16.gmra.mxu0 %v70
    %v85 = vpop.f32.mrf.mxu0
    %v86 = vadd.f32 %v66, %v85
    %v87 = vpop.f32.mrf.mxu0
    %v88 = vadd.f32 %v66, %v87
    %89 = vdwg.mxu0
    %v90 = vmax.f32 %v86, 0.0
    %v91 = vmax.f32 %v88, 0.0
    %v92 = vpack.c.bf16 %v91, %v90
    %v93 = vld [vmem:[#allocation2] sm:$0xf]
    %v94 = vld [vmem:[#allocation2 + $0x4] sm:$0xf]
    %v95 = vld [vmem:[#allocation2 + $0x8] sm:$0xf]
    %v96 = vld [vmem:[#allocation2 + $0xc] sm:$0xf]
    %v97 = vld [vmem:[#allocation2 + $0x10] sm:$0xf]
    %v98 = vld [vmem:[#allocation2 + $0x14] sm:$0xf]
    %v99 = vld [vmem:[#allocation2 + $0x18] sm:$0xf]
    %v100 = vld [vmem:[#allocation2 + $0x1c] sm:$0xf]
    %v101 = vld [vmem:[#allocation2 + $0x20] sm:$0xf]
    %v102 = vld [vmem:[#allocation2 + $0x24] sm:$0xf]
    %v103 = vld [vmem:[#allocation2 + $0x28] sm:$0xf]
    %v104 = vld [vmem:[#allocation2 + $0x2c] sm:$0xf]
    %v105 = vld [vmem:[#allocation2 + $0x30] sm:$0xf]
    %v106 = vld [vmem:[#allocation2 + $0x34] sm:$0xf]
    %v107 = vld [vmem:[#allocation2 + $0x38] sm:$0xf]
    %v108 = vld [vmem:[#allocation2 + $0x3c] sm:$0xf]
    %v109 = vld [vmem:[%s5] sm:$0x1]
    %v111 = vperm.slane %v109, 0
    %v129 = vunpack.c.l.b16 %v93
    %v130 = vunpack.c.l.b16 %v94
    %v131 = vunpack.c.l.b16 %v95
    %v132 = vunpack.c.l.b16 %v96
    %v133 = vunpack.c.l.b16 %v97
    %v134 = vunpack.c.l.b16 %v98
    %v135 = vunpack.c.l.b16 %v99
    %v136 = vunpack.c.l.b16 %v100
    %v137 = vunpack.c.l.b16 %v101
    %v138 = vunpack.c.l.b16 %v102
    %v139 = vunpack.c.l.b16 %v103
    %v140 = vunpack.c.l.b16 %v104
    %v141 = vunpack.c.l.b16 %v105
    %v142 = vunpack.c.l.b16 %v106
    %v143 = vunpack.c.l.b16 %v107
    %v144 = vunpack.c.l.b16 %v108
    %v145 = vpack.c.b16 %v130, %v129
    %v146 = vpack.c.b16 %v132, %v131
    %v147 = vpack.c.b16 %v134, %v133
    %v148 = vpack.c.b16 %v136, %v135
    %v149 = vpack.c.b16 %v138, %v137
    %v150 = vpack.c.b16 %v140, %v139
    %v151 = vpack.c.b16 %v142, %v141
    %v152 = vpack.c.b16 %v144, %v143
    %161 = vmatpush.bf16.msra.mxu0 %v152
    %162 = vmatpush.bf16.msra.mxu0 %v151
    %163 = vmatpush.bf16.msra.mxu0 %v150
    %164 = vmatpush.bf16.msra.mxu0 %v149
    %165 = vmatpush.bf16.msra.mxu0 %v148
    %166 = vmatpush.bf16.msra.mxu0 %v147
    %167 = vmatpush.bf16.msra.mxu0 %v146
    %168 = vmatpush.bf16.msra.mxu0 %v145
    %169 = vmatmul.bf16.gmra.mxu0 %v92
    %v170 = vpop.f32.mrf.mxu0
    %v171 = vadd.f32 %v111, %v170
    %v172 = vpop.f32.mrf.mxu0
    %v173 = vadd.f32 %v111, %v172
    %174 = vdwg.mxu0
    %v175 = vmax.f32 %v171, 0.0
    %v176 = vmax.f32 %v173, 0.0
    %v177 = vpack.c.bf16 %v176, %v175
    %v178 = vld [vmem:[#allocation5] sm:$0xf]
    %v179 = vld [vmem:[#allocation5 + $0x4] sm:$0xf]
    %v180 = vld [vmem:[#allocation5 + $0x8] sm:$0xf]
    %v181 = vld [vmem:[#allocation5 + $0xc] sm:$0xf]
    %v182 = vld [vmem:[#allocation5 + $0x10] sm:$0xf]
    %v183 = vld [vmem:[#allocation5 + $0x14] sm:$0xf]
    %v184 = vld [vmem:[#allocation5 + $0x18] sm:$0xf]
    %v185 = vld [vmem:[#allocation5 + $0x1c] sm:$0xf]
    %v186 = vld [vmem:[#allocation5 + $0x20] sm:$0xf]
    %v187 = vld [vmem:[#allocation5 + $0x24] sm:$0xf]
    %v188 = vld [vmem:[#allocation5 + $0x28] sm:$0xf]
    %v189 = vld [vmem:[#allocation5 + $0x2c] sm:$0xf]
    %v190 = vld [vmem:[#allocation5 + $0x30] sm:$0xf]
    %v191 = vld [vmem:[#allocation5 + $0x34] sm:$0xf]
    %v192 = vld [vmem:[#allocation5 + $0x38] sm:$0xf]
    %v193 = vld [vmem:[#allocation5 + $0x3c] sm:$0xf]
    %v194 = vld [vmem:[%s6] sm:$0x1]
    %v196 = vperm.slane %v194, 0
    %v214 = vunpack.c.l.b16 %v178
    %v215 = vunpack.c.l.b16 %v179
    %v216 = vunpack.c.l.b16 %v180
    %v217 = vunpack.c.l.b16 %v181
    %v218 = vunpack.c.l.b16 %v182
    %v219 = vunpack.c.l.b16 %v183
    %v220 = vunpack.c.l.b16 %v184
    %v221 = vunpack.c.l.b16 %v185
    %v222 = vunpack.c.l.b16 %v186
    %v223 = vunpack.c.l.b16 %v187
    %v224 = vunpack.c.l.b16 %v188
    %v225 = vunpack.c.l.b16 %v189
    %v226 = vunpack.c.l.b16 %v190
    %v227 = vunpack.c.l.b16 %v191
    %v228 = vunpack.c.l.b16 %v192
    %v229 = vunpack.c.l.b16 %v193
    %v230 = vpack.c.b16 %v215, %v214
    %v231 = vpack.c.b16 %v217, %v216
    %v232 = vpack.c.b16 %v219, %v218
    %v233 = vpack.c.b16 %v221, %v220
    %v234 = vpack.c.b16 %v223, %v222
    %v235 = vpack.c.b16 %v225, %v224
    %v236 = vpack.c.b16 %v227, %v226
    %v237 = vpack.c.b16 %v229, %v228
    %246 = vmatpush.bf16.msra.mxu0 %v237
    %247 = vmatpush.bf16.msra.mxu0 %v236
    %248 = vmatpush.bf16.msra.mxu0 %v235
    %249 = vmatpush.bf16.msra.mxu0 %v234
    %250 = vmatpush.bf16.msra.mxu0 %v233
    %251 = vmatpush.bf16.msra.mxu0 %v232
    %252 = vmatpush.bf16.msra.mxu0 %v231
    %253 = vmatpush.bf16.msra.mxu0 %v230
    %254 = vmatmul.bf16.gmra.mxu0 %v177
    %v255 = vpop.f32.mrf.mxu0
    %v256 = vadd.f32 %v196, %v255
    %v257 = vpop.f32.mrf.mxu0
    %v258 = vadd.f32 %v196, %v257
    %259 = vdwg.mxu0
    %260 = vst [vmem:[#allocation7] sm:$0xff] %v256
    %261 = vst [vmem:[#allocation7 + $0x8] sm:$0xff] %v258
    // Predicated region
    $region38: #{tpu_custom_call.1} parent=1 // pred_check
      _
    $region39: #{tpu_custom_call.1} parent=1 // pred_check_branch
      %263 = sbr.rel (0) target = $region41
    $region40: #{tpu_custom_call.1} parent=1 // pred_region
      %265 = vsyncadd [#allocation4], 0
      %s266 = sshll.u32 [#allocation7], 4
      %s267 = int_to_ptr.vmem [resolvable:$true] %s266
      %s268 = sshll.u32 %s7, 4
      %s269 = int_to_ptr.hbm [resolvable:$true] %s268
      %274 = dma.vmem_to_hbm [thread:$0]  %s267, 256, %s269, [#allocation4], 128, 128, 8
    $region41: #{tpu_custom_call.1} parent=1 // pred_fallthru
      _
    // Predicated region
    $region42: #{tpu_custom_call.1} parent=1 // pred_check
      _
    $region43: #{tpu_custom_call.1} parent=1 // pred_check_branch
      %276 = sbr.rel (0) target = $region45
    $region44: #{tpu_custom_call.1} parent=1 // pred_region
      %278 = dma.done [#allocation4], 256
    $region45: #{tpu_custom_call.1} parent=1 // pred_fallthru
      _
    %279 = vsyncpa [#allocation3], 1
    %280 = vsyncpa [#allocation6], 1
    %281 = vsyncpa [#allocation4], 1

// kernel: tpu_custom_call.1
$region0: #{tpu_custom_call.1}
  #allocation0 [shape = 'u32[]', space=smem, size = 0x4, offset = 0x4, fixed_abs, tag = 'smem constant byte address 0x4 - core index']
  #allocation1 [shape = 'u32[72,128]{1,0:T(1,128)}', space=vmem, size = 0x9000, scoped, tag = 'internal scratch']
  %s0 = inlined_call_operand.vmem [shape: f32[16,4], index: 0, kind: input, shape index: {}]
  %s1 = inlined_call_operand.vmem [shape: bf16[4,128], index: 1, kind: input, shape index: {}]
  %s2 = inlined_call_operand.hbm [shape: bf16[128,128], index: 2, kind: input, shape index: {}]
  %s3 = inlined_call_operand.hbm [shape: bf16[128,128], index: 3, kind: input, shape index: {}]
  %s4 = inlined_call_operand.vmem [shape: f32[1,128], index: 4, kind: input, shape index: {}]
  %s5 = inlined_call_operand.vmem [shape: f32[1,128], index: 5, kind: input, shape index: {}]
  %s6 = inlined_call_operand.vmem [shape: f32[1,128], index: 6, kind: input, shape index: {}]
  %s7 = inlined_call_operand.hbm [shape: f32[16,128], index: 7, kind: output, shape index: {}]
  %s8 = sld [smem:[#allocation0]]
  $region46: #{tpu_custom_call.1} parent=0
    _
  %s10 = ssub.s32 1, %s8
  %s11 = scalar_select 0, %s10, %s8
  $region1: #{tpu_custom_call.1} parent=0
    #allocation2 [shape = 'u8[32768]{0}', space=vmem, size = 0x8000, scoped, tag = 'input window, operand 2, single buffered']
    #allocation3 [shape = 's32[1]{0}', space=sflag, size = 0x4, scoped, tag = 'scoped memory for tpu_custom_call.1']
    #allocation4 [shape = 's32[1]{0}', space=sflag, size = 0x4, scoped, tag = 'scoped memory for tpu_custom_call.1']
    #allocation5 [shape = 'u8[32768]{0}', space=vmem, size = 0x8000, scoped, tag = 'input window, operand 3, single buffered']
    #allocation6 [shape = 's32[1]{0}', space=sflag, size = 0x4, scoped, tag = 'scoped memory for tpu_custom_call.1']
    #allocation7 [shape = 'u8[8192]{0}', space=vmem, size = 0x2000, scoped, tag = 'output window, operand 0, single buffered']
    %12 = vsyncpa [#allocation3], 0
    %13 = vsyncpa [#allocation6], 0
    %14 = vsyncpa [#allocation4], 0
    // Predicated region
    $region2: #{tpu_custom_call.1} parent=1 // pred_check
      _
    $region3: #{tpu_custom_call.1} parent=1 // pred_check_branch
      %16 = sbr.rel (0) target = $region5
    $region4: #{tpu_custom_call.1} parent=1 // pred_region
      _
    $region5: #{tpu_custom_call.1} parent=1 // pred_fallthru
      _
    // Predicated region
    $region6: #{tpu_custom_call.1} parent=1 // pred_check
      _
    $region7: #{tpu_custom_call.1} parent=1 // pred_check_branch
      %18 = sbr.rel (0) target = $region9
    $region8: #{tpu_custom_call.1} parent=1 // pred_region
      _
    $region9: #{tpu_custom_call.1} parent=1 // pred_fallthru
      _
    // Predicated region
    $region10: #{tpu_custom_call.1} parent=1 // pred_check
      _
    $region11: #{tpu_custom_call.1} parent=1 // pred_check_branch
      %20 = sbr.rel (0) target = $region13
    $region12: #{tpu_custom_call.1} parent=1 // pred_region
      %22 = vsyncadd [#allocation3], 0
      %s23 = sshll.u32 %s2, 4
      %s24 = int_to_ptr.hbm [resolvable:$true] %s23
      %s25 = sshll.u32 [#allocation2], 4
      %s26 = int_to_ptr.vmem [resolvable:$true] %s25
      %31 = dma.hbm_to_vmem [thread:$0]  %s24, 1024, %s26, [#allocation3], 64, 64, 4
    $region13: #{tpu_custom_call.1} parent=1 // pred_fallthru
      _
    // Predicated region
    $region14: #{tpu_custom_call.1} parent=1 // pred_check
      _
    $region15: #{tpu_custom_call.1} parent=1 // pred_check_branch
      %33 = sbr.rel (0) target = $region17
    $region16: #{tpu_custom_call.1} parent=1 // pred_region
      %35 = vsyncadd [#allocation6], 0
      %s36 = sshll.u32 %s3, 4
      %s37 = int_to_ptr.hbm [resolvable:$true] %s36
      %s38 = sshll.u32 [#allocation5], 4
      %s39 = int_to_ptr.vmem [resolvable:$true] %s38
      %44 = dma.hbm_to_vmem [thread:$0]  %s37, 1024, %s39, [#allocation6], 64, 64, 4
    $region17: #{tpu_custom_call.1} parent=1 // pred_fallthru
      _
    // Predicated region
    $region18: #{tpu_custom_call.1} parent=1 // pred_check
      _
    $region19: #{tpu_custom_call.1} parent=1 // pred_check_branch
      %46 = sbr.rel (0) target = $region21
    $region20: #{tpu_custom_call.1} parent=1 // pred_region
      _
    $region21: #{tpu_custom_call.1} parent=1 // pred_fallthru
      _
    // Predicated region
    $region22: #{tpu_custom_call.1} parent=1 // pred_check
      _
    $region23: #{tpu_custom_call.1} parent=1 // pred_check_branch
      %48 = sbr.rel (0) target = $region25
    $region24: #{tpu_custom_call.1} parent=1 // pred_region
      _
    $region25: #{tpu_custom_call.1} parent=1 // pred_fallthru
      _
    // Predicated region
    $region26: #{tpu_custom_call.1} parent=1 // pred_check
      _
    $region27: #{tpu_custom_call.1} parent=1 // pred_check_branch
      %50 = sbr.rel (0) target = $region29
    $region28: #{tpu_custom_call.1} parent=1 // pred_region
      _
    $region29: #{tpu_custom_call.1} parent=1 // pred_fallthru
      _
    // Predicated region
    $region30: #{tpu_custom_call.1} parent=1 // pred_check
      _
    $region31: #{tpu_custom_call.1} parent=1 // pred_check_branch
      %52 = sbr.rel (0) target = $region33
    $region32: #{tpu_custom_call.1} parent=1 // pred_region
      %54 = dma.done [#allocation3], 1024
    $region33: #{tpu_custom_call.1} parent=1 // pred_fallthru
      _
    // Predicated region
    $region34: #{tpu_custom_call.1} parent=1 // pred_check
      _
    $region35: #{tpu_custom_call.1} parent=1 // pred_check_branch
      %56 = sbr.rel (0) target = $region37
    $region36: #{tpu_custom_call.1} parent=1 // pred_region
      %58 = dma.done [#allocation6], 1024
    $region37: #{tpu_custom_call.1} parent=1 // pred_fallthru
      _
    %v60 = vld [vmem:[%s0] sm:$0xff]
    %v61 = vld [vmem:[%s0 + $0x8] sm:$0xff]
    %v62 = vpack.c.bf16 %v61, %v60
    %v63 = vld [vmem:[%s1] sm:$0x3]
    %v64 = vld [vmem:[%s4] sm:$0x1]
    %v66 = vperm.slane %v64, 0
    %vm68 = vcmask 31744
    %v70 = vsel %vm68, %v62, 0
    %vm72 = vcmask 1041408
    %v74 = vsel %vm72, %v63, 0
    %76 = vmatpush.bf16.msra.mxu0 0
    %77 = vmatpush.bf16.msra.mxu0 0
    %78 = vmatpush.bf16.msra.mxu0 0
    %79 = vmatpush.bf16.msra.mxu0 0
    %80 = vmatpush.bf16.msra.mxu0 0
    %81 = vmatpush.bf16.msra.mxu0 0
    %82 = vmatpush.bf16.msra.mxu0 0
    %83 = vmatpush.bf16.msra.mxu0 %v74
    %84 = vmatmul.bf16.gmra.mxu0 %v70
    %v85 = vpop.f32.mrf.mxu0
    %v86 = vadd.f32 %v66, %v85
    %v87 = vpop.f32.mrf.mxu0
    %v88 = vadd.f32 %v66, %v87
    %89 = vdwg.mxu0
    %v90 = vmax.f32 %v86, 0.0
    %v91 = vmax.f32 %v88, 0.0
    %v92 = vpack.c.bf16 %v91, %v90
    %v93 = vld [vmem:[#allocation2] sm:$0xf]
    %v94 = vld [vmem:[#allocation2 + $0x4] sm:$0xf]
    %v95 = vld [vmem:[#allocation2 + $0x8] sm:$0xf]
    %v96 = vld [vmem:[#allocation2 + $0xc] sm:$0xf]
    %v97 = vld [vmem:[#allocation2 + $0x10] sm:$0xf]
    %v98 = vld [vmem:[#allocation2 + $0x14] sm:$0xf]
    %v99 = vld [vmem:[#allocation2 + $0x18] sm:$0xf]
    %v100 = vld [vmem:[#allocation2 + $0x1c] sm:$0xf]
    %v101 = vld [vmem:[#allocation2 + $0x20] sm:$0xf]
    %v102 = vld [vmem:[#allocation2 + $0x24] sm:$0xf]
    %v103 = vld [vmem:[#allocation2 + $0x28] sm:$0xf]
    %v104 = vld [vmem:[#allocation2 + $0x2c] sm:$0xf]
    %v105 = vld [vmem:[#allocation2 + $0x30] sm:$0xf]
    %v106 = vld [vmem:[#allocation2 + $0x34] sm:$0xf]
    %v107 = vld [vmem:[#allocation2 + $0x38] sm:$0xf]
    %v108 = vld [vmem:[#allocation2 + $0x3c] sm:$0xf]
    %v109 = vld [vmem:[%s5] sm:$0x1]
    %v111 = vperm.slane %v109, 0
    %v129 = vunpack.c.l.b16 %v93
    %v130 = vunpack.c.l.b16 %v94
    %v131 = vunpack.c.l.b16 %v95
    %v132 = vunpack.c.l.b16 %v96
    %v133 = vunpack.c.l.b16 %v97
    %v134 = vunpack.c.l.b16 %v98
    %v135 = vunpack.c.l.b16 %v99
    %v136 = vunpack.c.l.b16 %v100
    %v137 = vunpack.c.l.b16 %v101
    %v138 = vunpack.c.l.b16 %v102
    %v139 = vunpack.c.l.b16 %v103
    %v140 = vunpack.c.l.b16 %v104
    %v141 = vunpack.c.l.b16 %v105
    %v142 = vunpack.c.l.b16 %v106
    %v143 = vunpack.c.l.b16 %v107
    %v144 = vunpack.c.l.b16 %v108
    %v145 = vpack.c.b16 %v130, %v129
    %v146 = vpack.c.b16 %v132, %v131
    %v147 = vpack.c.b16 %v134, %v133
    %v148 = vpack.c.b16 %v136, %v135
    %v149 = vpack.c.b16 %v138, %v137
    %v150 = vpack.c.b16 %v140, %v139
    %v151 = vpack.c.b16 %v142, %v141
    %v152 = vpack.c.b16 %v144, %v143
    %161 = vmatpush.bf16.msra.mxu0 %v152
    %162 = vmatpush.bf16.msra.mxu0 %v151
    %163 = vmatpush.bf16.msra.mxu0 %v150
    %164 = vmatpush.bf16.msra.mxu0 %v149
    %165 = vmatpush.bf16.msra.mxu0 %v148
    %166 = vmatpush.bf16.msra.mxu0 %v147
    %167 = vmatpush.bf16.msra.mxu0 %v146
    %168 = vmatpush.bf16.msra.mxu0 %v145
    %169 = vmatmul.bf16.gmra.mxu0 %v92
    %v170 = vpop.f32.mrf.mxu0
    %v171 = vadd.f32 %v111, %v170
    %v172 = vpop.f32.mrf.mxu0
    %v173 = vadd.f32 %v111, %v172
    %174 = vdwg.mxu0
    %v175 = vmax.f32 %v171, 0.0
    %v176 = vmax.f32 %v173, 0.0
    %v177 = vpack.c.bf16 %v176, %v175
    %v178 = vld [vmem:[#allocation5] sm:$0xf]
    %v179 = vld [vmem:[#allocation5 + $0x4] sm:$0xf]
    %v180 = vld [vmem:[#allocation5 + $0x8] sm:$0xf]
    %v181 = vld [vmem:[#allocation5 + $0xc] sm:$0xf]
    %v182 = vld [vmem:[#allocation5 + $0x10] sm:$0xf]
    %v183 = vld [vmem:[#allocation5 + $0x14] sm:$0xf]
    %v184 = vld [vmem:[#allocation5 + $0x18] sm:$0xf]
    %v185 = vld [vmem:[#allocation5 + $0x1c] sm:$0xf]
    %v186 = vld [vmem:[#allocation5 + $0x20] sm:$0xf]
    %v187 = vld [vmem:[#allocation5 + $0x24] sm:$0xf]
    %v188 = vld [vmem:[#allocation5 + $0x28] sm:$0xf]
    %v189 = vld [vmem:[#allocation5 + $0x2c] sm:$0xf]
    %v190 = vld [vmem:[#allocation5 + $0x30] sm:$0xf]
    %v191 = vld [vmem:[#allocation5 + $0x34] sm:$0xf]
    %v192 = vld [vmem:[#allocation5 + $0x38] sm:$0xf]
    %v193 = vld [vmem:[#allocation5 + $0x3c] sm:$0xf]
    %v194 = vld [vmem:[%s6] sm:$0x1]
    %v196 = vperm.slane %v194, 0
    %v214 = vunpack.c.l.b16 %v178
    %v215 = vunpack.c.l.b16 %v179
    %v216 = vunpack.c.l.b16 %v180
    %v217 = vunpack.c.l.b16 %v181
    %v218 = vunpack.c.l.b16 %v182
    %v219 = vunpack.c.l.b16 %v183
    %v220 = vunpack.c.l.b16 %v184
    %v221 = vunpack.c.l.b16 %v185
    %v222 = vunpack.c.l.b16 %v186
    %v223 = vunpack.c.l.b16 %v187
    %v224 = vunpack.c.l.b16 %v188
    %v225 = vunpack.c.l.b16 %v189
    %v226 = vunpack.c.l.b16 %v190
    %v227 = vunpack.c.l.b16 %v191
    %v228 = vunpack.c.l.b16 %v192
    %v229 = vunpack.c.l.b16 %v193
    %v230 = vpack.c.b16 %v215, %v214
    %v231 = vpack.c.b16 %v217, %v216
    %v232 = vpack.c.b16 %v219, %v218
    %v233 = vpack.c.b16 %v221, %v220
    %v234 = vpack.c.b16 %v223, %v222
    %v235 = vpack.c.b16 %v225, %v224
    %v236 = vpack.c.b16 %v227, %v226
    %v237 = vpack.c.b16 %v229, %v228
    %246 = vmatpush.bf16.msra.mxu0 %v237
    %247 = vmatpush.bf16.msra.mxu0 %v236
    %248 = vmatpush.bf16.msra.mxu0 %v235
    %249 = vmatpush.bf16.msra.mxu0 %v234
    %250 = vmatpush.bf16.msra.mxu0 %v233
    %251 = vmatpush.bf16.msra.mxu0 %v232
    %252 = vmatpush.bf16.msra.mxu0 %v231
    %253 = vmatpush.bf16.msra.mxu0 %v230
    %254 = vmatmul.bf16.gmra.mxu0 %v177
    %v255 = vpop.f32.mrf.mxu0
    %v256 = vadd.f32 %v196, %v255
    %v257 = vpop.f32.mrf.mxu0
    %v258 = vadd.f32 %v196, %v257
    %259 = vdwg.mxu0
    %260 = vst [vmem:[#allocation7] sm:$0xff] %v256
    %261 = vst [vmem:[#allocation7 + $0x8] sm:$0xff] %v258
    // Predicated region
    $region38: #{tpu_custom_call.1} parent=1 // pred_check
      _
    $region39: #{tpu_custom_call.1} parent=1 // pred_check_branch
      %263 = sbr.rel (0) target = $region41
    $region40: #{tpu_custom_call.1} parent=1 // pred_region
      %265 = vsyncadd [#allocation4], 0
      %s266 = sshll.u32 [#allocation7], 4
      %s267 = int_to_ptr.vmem [resolvable:$true] %s266
      %s268 = sshll.u32 %s7, 4
      %s269 = int_to_ptr.hbm [resolvable:$true] %s268
      %274 = dma.vmem_to_hbm [thread:$0]  %s267, 256, %s269, [#allocation4], 128, 128, 8
    $region41: #{tpu_custom_call.1} parent=1 // pred_fallthru
      _
    // Predicated region
    $region42: #{tpu_custom_call.1} parent=1 // pred_check
      _
    $region43: #{tpu_custom_call.1} parent=1 // pred_check_branch
      %276 = sbr.rel (0) target = $region45
    $region44: #{tpu_custom_call.1} parent=1 // pred_region
      %278 = dma.done [#allocation4], 256
    $region45: #{tpu_custom_call.1} parent=1 // pred_fallthru
      _
    %279 = vsyncpa [#allocation3], 1
    %280 = vsyncpa [#allocation6], 1
    %281 = vsyncpa [#allocation4], 1

</llo_original>
